<compile_context>
chip_gen: v7x
topology: tpu7x:2x2x1
jax: 0.10.0
libtpu: 0.0.40
codegen_flags: <defaults>
</compile_context>

<pallas_src>
import functools

import jax
import jax.numpy as jnp
from jax.experimental import pallas as pl
from jax.experimental.pallas import tpu as pltpu


def _inference_kernel(xT_ref, w1_ref, b1_ref, w2_ref, b2_ref, out_ref):
    # fc1: [H, In] @ [In, TM] -> [H, TM]   (MXU, lane-dense result)
    z = jnp.dot(w1_ref[...], xT_ref[...], preferred_element_type=jnp.float32)
    z = z + b1_ref[...]                       # [H, 1] broadcast along lanes
    a = jnp.tanh(z)                           # EUP
    a = a.astype(w2_ref.dtype)                # bf16 only if wrapper passed bf16 weights
    # fc2: [O, H] @ [H, TM] -> [O, TM]
    z2 = jnp.dot(w2_ref[...], a, preferred_element_type=jnp.float32)
    z2 = z2 + b2_ref[...]                     # [O, 1] broadcast along lanes
    # stable sigmoid: no overflow for very negative z2 (pl.reciprocal(approx=True)
    # would be free on the EUP but costs ~1e-4 accuracy, so keep the exact divide).
    e = jnp.exp(-jnp.abs(z2))
    h = jnp.where(z2 >= 0, 1.0, e) / (1.0 + e)
    eps = jnp.float32(1e-8)
    # reproduces torch operator precedence:  log(h + 1e-8 / (1 - h + 1e-8))
    h_new = jnp.log(h + eps / (1.0 - h + eps))
    # single merged output slab: rows [:O] = h_new, rows [O:] = h
    out_ref[...] = jnp.concatenate([h_new, h], axis=0).astype(out_ref.dtype)


def _round_up(x, m):
    return (x + m - 1) // m * m


@functools.partial(jax.jit, static_argnames=("block_m", "use_bf16_matmul"))
def inference_forward(x, w1, b1, w2, b2, *, block_m=512, use_bf16_matmul=False):
    """x: [B, dim, In]; w1: [H, In], b1: [H], w2: [O, H], b2: [O] (PyTorch layout).

    Returns (h_new, h), each [B, dim, O].
    """
    B, D, In = x.shape
    H = w1.shape[0]
    O = w2.shape[0]
    M = B * D

    # Lane-dense layout: rows on the lane axis (cheap XLA transpose in the wrapper).
    xT = x.reshape(M, In).T                                  # [In, M]
    b1c = b1.reshape(H, 1)
    b2c = b2.reshape(O, 1)

    # Pad M to a multiple of the lane tile; tile <= block_m (512 rows by default).
    tm = min(_round_up(M, 128), _round_up(block_m, 128))
    m_pad = _round_up(M, tm)
    if m_pad != M:
        xT = jnp.pad(xT, ((0, 0), (0, m_pad - M)))

    if use_bf16_matmul:  # bf16-native MXU on v6e/v7x; keep f32 elsewhere
        xT = xT.astype(jnp.bfloat16)
        w1 = w1.astype(jnp.bfloat16)
        w2 = w2.astype(jnp.bfloat16)

    out = pl.pallas_call(
        _inference_kernel,
        out_shape=jax.ShapeDtypeStruct((2 * O, m_pad), jnp.float32),
        grid=(m_pad // tm,),
        in_specs=[
            pl.BlockSpec((In, tm), lambda i: (0, i)),        # streamed x tile
            pl.BlockSpec((H, In), lambda i: (0, 0)),         # resident weights
            pl.BlockSpec((H, 1), lambda i: (0, 0)),
            pl.BlockSpec((O, H), lambda i: (0, 0)),
            pl.BlockSpec((O, 1), lambda i: (0, 0)),
        ],
        out_specs=pl.BlockSpec((2 * O, tm), lambda i: (0, i)),  # merged output slab
        compiler_params=pltpu.CompilerParams(
            dimension_semantics=("parallel",),               # 2-TC sharding on v7x
        ),
    )(xT, w1, b1c, w2, b2c)

    out = out[:, :M]                                         # drop lane padding
    h_new = out[:O, :].T.reshape(B, D, O)
    h = out[O:, :].T.reshape(B, D, O)
    return h_new, h


def init_params(key, in_features, hidden, out_features):
    """PyTorch-Linear-style init, stored in PyTorch layout W:[out, in]."""
    k1, k2, k3, k4 = jax.random.split(key, 4)
    lim1 = 1.0 / (in_features ** 0.5)
    lim2 = 1.0 / (hidden ** 0.5)
    w1 = jax.random.uniform(k1, (hidden, in_features), jnp.float32, -lim1, lim1)
    b1 = jax.random.uniform(k2, (hidden,), jnp.float32, -lim1, lim1)
    w2 = jax.random.uniform(k3, (out_features, hidden), jnp.float32, -lim2, lim2)
    b2 = jax.random.uniform(k4, (out_features,), jnp.float32, -lim2, lim2)
    return w1, b1, w2, b2


# TODO(synk): the individual=True branch (per-dim Linear ModuleLists) is not
# implemented; the reference forward for that branch also returns an undefined
# h_new, so only the individual=False path is translated.

if __name__ == "__main__":
    # small shapes consistent with the module: lookback, hidden, output=2, dim=7
    B, DIM, IN, HID, OUT = 2, 7, 32, 16, 2

    key = jax.random.PRNGKey(0)
    kx, kp = jax.random.split(key)
    x = jax.random.normal(kx, (B, DIM, IN), jnp.float32)
    w1, b1, w2, b2 = init_params(kp, IN, HID, OUT)

    h_new, h = inference_forward(x, w1, b1, w2, b2)
    jax.block_until_ready((h_new, h))

    # pure-JAX reference
    z = jnp.tanh(x @ w1.T + b1) @ w2.T + b2
    h_ref = jax.nn.sigmoid(z)
    h_new_ref = jnp.log(h_ref + 1e-8 / (1.0 - h_ref + 1e-8))

    assert h.shape == (B, DIM, OUT) and h_new.shape == (B, DIM, OUT)
    assert jnp.allclose(h, h_ref, atol=1e-5, rtol=1e-5)
    assert jnp.allclose(h_new, h_new_ref, atol=1e-5, rtol=1e-5)

    print("KERNEL_OK")
</pallas_src>

<mosaic_0001>
module attributes {stable_mosaic.version = 11 : i64} {
  func.func @_inference_kernel(%arg0: i32, %arg1: memref<32x128xf32, #tpu.memory_space<vmem>>, %arg2: memref<16x32xf32, #tpu.memory_space<vmem>>, %arg3: memref<16x1xf32, #tpu.memory_space<vmem>>, %arg4: memref<2x16xf32, #tpu.memory_space<vmem>>, %arg5: memref<2x1xf32, #tpu.memory_space<vmem>>, %arg6: memref<4x128xf32, #tpu.memory_space<vmem>>) attributes {dimension_semantics = [#tpu.dimension_semantics<parallel>], iteration_bounds = array<i64: 1>, scalar_prefetch = 0 : i64, scratch_operands = 0 : i64, tpu.core_type = #tpu.core_type<tc>, window_params = [{transform_indices = @transform_0, window_bounds = array<i64: 32, 128>}, {pipeline_mode = #tpu.pipeline_mode<synchronous>, transform_indices = @transform_1, window_bounds = array<i64: 16, 32>}, {pipeline_mode = #tpu.pipeline_mode<synchronous>, transform_indices = @transform_2, window_bounds = array<i64: 16, 1>}, {pipeline_mode = #tpu.pipeline_mode<synchronous>, transform_indices = @transform_3, window_bounds = array<i64: 2, 16>}, {pipeline_mode = #tpu.pipeline_mode<synchronous>, transform_indices = @transform_4, window_bounds = array<i64: 2, 1>}, {transform_indices = @transform_5, window_bounds = array<i64: 4, 128>}]} {
    %c0 = arith.constant 0 : index
    %c0_0 = arith.constant 0 : index
    %0 = vector.load %arg2[%c0, %c0_0] : memref<16x32xf32, #tpu.memory_space<vmem>>, vector<16x32xf32>
    %c0_1 = arith.constant 0 : index
    %c0_2 = arith.constant 0 : index
    %1 = vector.load %arg1[%c0_1, %c0_2] : memref<32x128xf32, #tpu.memory_space<vmem>>, vector<32x128xf32>
    %cst = arith.constant dense<0.000000e+00> : vector<16x128xf32>
    %2 = tpu.matmul %0, %1, %cst {dimension_numbers = #tpu.dot_dimension_numbers<[1], [0], [0], [1], [0, 0, 1, 1], [], []>} : vector<16x32xf32>, vector<32x128xf32>, vector<16x128xf32> -> vector<16x128xf32>
    %c0_3 = arith.constant 0 : index
    %c0_4 = arith.constant 0 : index
    %3 = vector.load %arg3[%c0_3, %c0_4] : memref<16x1xf32, #tpu.memory_space<vmem>>, vector<16x1xf32>
    %4 = vector.broadcast %3 : vector<16x1xf32> to vector<16x128xf32>
    %5 = arith.addf %2, %4 : vector<16x128xf32>
    %6 = math.tanh %5 : vector<16x128xf32>
    %c0_5 = arith.constant 0 : index
    %c0_6 = arith.constant 0 : index
    %7 = vector.load %arg4[%c0_5, %c0_6] : memref<2x16xf32, #tpu.memory_space<vmem>>, vector<2x16xf32>
    %cst_7 = arith.constant dense<0.000000e+00> : vector<2x128xf32>
    %8 = tpu.matmul %7, %6, %cst_7 {dimension_numbers = #tpu.dot_dimension_numbers<[1], [0], [0], [1], [0, 0, 1, 1], [], []>} : vector<2x16xf32>, vector<16x128xf32>, vector<2x128xf32> -> vector<2x128xf32>
    %c0_8 = arith.constant 0 : index
    %c0_9 = arith.constant 0 : index
    %9 = vector.load %arg5[%c0_8, %c0_9] : memref<2x1xf32, #tpu.memory_space<vmem>>, vector<2x1xf32>
    %10 = vector.broadcast %9 : vector<2x1xf32> to vector<2x128xf32>
    %11 = arith.addf %8, %10 : vector<2x128xf32>
    %12 = math.absf %11 : vector<2x128xf32>
    %cst_10 = arith.constant 0.000000e+00 : f32
    %13 = vector.broadcast %cst_10 : f32 to vector<2x128xf32>
    %14 = arith.subf %13, %12 : vector<2x128xf32>
    %15 = math.exp %14 : vector<2x128xf32>
    %cst_11 = arith.constant 0.000000e+00 : f32
    %16 = vector.broadcast %cst_11 : f32 to vector<2x128xf32>
    %17 = arith.cmpf oge, %11, %16 : vector<2x128xf32>
    %cst_12 = arith.constant 1.000000e+00 : f32
    %18 = vector.broadcast %cst_12 : f32 to vector<2x128xf32>
    %19 = arith.select %17, %18, %15 : vector<2x128xi1>, vector<2x128xf32>
    %cst_13 = arith.constant 1.000000e+00 : f32
    %20 = vector.broadcast %cst_13 : f32 to vector<2x128xf32>
    %21 = arith.addf %20, %15 : vector<2x128xf32>
    %22 = arith.divf %19, %21 : vector<2x128xf32>
    %cst_14 = arith.constant 1.000000e+00 : f32
    %23 = vector.broadcast %cst_14 : f32 to vector<2x128xf32>
    %24 = arith.subf %23, %22 : vector<2x128xf32>
    %cst_15 = arith.constant 9.99999993E-9 : f32
    %25 = vector.broadcast %cst_15 : f32 to vector<2x128xf32>
    %26 = arith.addf %24, %25 : vector<2x128xf32>
    %cst_16 = arith.constant 9.99999993E-9 : f32
    %27 = vector.broadcast %cst_16 : f32 to vector<2x128xf32>
    %28 = arith.divf %27, %26 : vector<2x128xf32>
    %29 = arith.addf %22, %28 : vector<2x128xf32>
    %30 = math.log %29 : vector<2x128xf32>
    %31 = tpu.concatenate %30, %22 in 0 : vector<2x128xf32>, vector<2x128xf32> -> vector<4x128xf32>
    %c0_17 = arith.constant 0 : index
    %c0_18 = arith.constant 0 : index
    %32 = vector.load %arg6[%c0_17, %c0_18] : memref<4x128xf32, #tpu.memory_space<vmem>>, vector<4x128xf32>
    tpu.vector_store %arg6[%c0_17, %c0_18], %31 {strides = array<i32>} : memref<4x128xf32, #tpu.memory_space<vmem>>, vector<4x128xf32>,
    return
  }
  func.func @transform_0(%arg0: i32) -> (i32, i32) {
    %c0_i32 = arith.constant 0 : i32
    %c0_i32_0 = arith.constant 0 : i32
    return %c0_i32, %arg0 : i32, i32
  }
  func.func @transform_1(%arg0: i32) -> (i32, i32) {
    %c0_i32 = arith.constant 0 : i32
    %c0_i32_0 = arith.constant 0 : i32
    %c0_i32_1 = arith.constant 0 : i32
    return %c0_i32, %c0_i32_0 : i32, i32
  }
  func.func @transform_2(%arg0: i32) -> (i32, i32) {
    %c0_i32 = arith.constant 0 : i32
    %c0_i32_0 = arith.constant 0 : i32
    %c0_i32_1 = arith.constant 0 : i32
    return %c0_i32, %c0_i32_0 : i32, i32
  }
  func.func @transform_3(%arg0: i32) -> (i32, i32) {
    %c0_i32 = arith.constant 0 : i32
    %c0_i32_0 = arith.constant 0 : i32
    %c0_i32_1 = arith.constant 0 : i32
    return %c0_i32, %c0_i32_0 : i32, i32
  }
  func.func @transform_4(%arg0: i32) -> (i32, i32) {
    %c0_i32 = arith.constant 0 : i32
    %c0_i32_0 = arith.constant 0 : i32
    %c0_i32_1 = arith.constant 0 : i32
    return %c0_i32, %c0_i32_0 : i32, i32
  }
  func.func @transform_5(%arg0: i32) -> (i32, i32) {
    %c0_i32 = arith.constant 0 : i32
    %c0_i32_0 = arith.constant 0 : i32
    return %c0_i32, %arg0 : i32, i32
  }
}

</mosaic_0001>

<llo_original>
// kernel: inference_forward.1
$region0: #{inference_forward.1}
  #allocation0 [shape = 'u32[]', space=smem, size = 0x4, offset = 0x4, fixed_abs, tag = 'smem constant byte address 0x4 - core index']
  #allocation1 [shape = 'u32[144,128]{1,0:T(1,128)}', space=vmem, size = 0x12000, scoped, tag = 'internal scratch']
  %s0 = inlined_call_operand.vmem [shape: f32[32,128], index: 0, kind: input, shape index: {}]
  %s1 = inlined_call_operand.vmem [shape: f32[16,32], index: 1, kind: input, shape index: {}]
  %s2 = inlined_call_operand.vmem [shape: f32[16,1], index: 2, kind: input, shape index: {}]
  %s3 = inlined_call_operand.vmem [shape: f32[2,16], index: 3, kind: input, shape index: {}]
  %s4 = inlined_call_operand.vmem [shape: f32[2,1], index: 4, kind: input, shape index: {}]
  %s5 = inlined_call_operand.vmem [shape: f32[4,128], index: 5, kind: output, shape index: {}]
  %s6 = sld [smem:[#allocation0]]
  $region30: #{inference_forward.1} parent=0
    _
  %s8 = ssub.s32 1, %s6
  %s9 = scalar_select 0, %s8, %s6
  // Predicated region
  $region2: #{inference_forward.1} parent=0 // pred_check
    _
  $region3: #{inference_forward.1} parent=0 // pred_check_branch
    %11 = sbr.rel (0) target = $region5
  $region4: #{inference_forward.1} parent=0 // pred_region
    _
  $region5: #{inference_forward.1} parent=0 // pred_fallthru
    _
  // Predicated region
  $region6: #{inference_forward.1} parent=0 // pred_check
    _
  $region7: #{inference_forward.1} parent=0 // pred_check_branch
    %13 = sbr.rel (0) target = $region9
  $region8: #{inference_forward.1} parent=0 // pred_region
    _
  $region9: #{inference_forward.1} parent=0 // pred_fallthru
    _
  // Predicated region
  $region10: #{inference_forward.1} parent=0 // pred_check
    _
  $region11: #{inference_forward.1} parent=0 // pred_check_branch
    %15 = sbr.rel (0) target = $region13
  $region12: #{inference_forward.1} parent=0 // pred_region
    _
  $region13: #{inference_forward.1} parent=0 // pred_fallthru
    _
  // Predicated region
  $region14: #{inference_forward.1} parent=0 // pred_check
    _
  $region15: #{inference_forward.1} parent=0 // pred_check_branch
    %17 = sbr.rel (0) target = $region17
  $region16: #{inference_forward.1} parent=0 // pred_region
    _
  $region17: #{inference_forward.1} parent=0 // pred_fallthru
    _
  // Predicated region
  $region18: #{inference_forward.1} parent=0 // pred_check
    _
  $region19: #{inference_forward.1} parent=0 // pred_check_branch
    %19 = sbr.rel (0) target = $region21
  $region20: #{inference_forward.1} parent=0 // pred_region
    _
  $region21: #{inference_forward.1} parent=0 // pred_fallthru
    _
  %v20 = vld [vmem:[%s1] sm:$0xff]
  %v21 = vld [vmem:[%s1 + $0x8] sm:$0xff]
  %v22 = vld [vmem:[%s0] sm:$0xff]
  %v23 = vld [vmem:[%s0 + $0x8] sm:$0xff]
  %v24 = vld [vmem:[%s0 + $0x10] sm:$0xff]
  %v25 = vld [vmem:[%s0 + $0x18] sm:$0xff]
  %v26 = vld [vmem:[%s2] sm:$0xff]
  %v27 = vld [vmem:[%s2 + $0x8] sm:$0xff]
  %29 = vset.pattern.permute.xlu0 0
  %30 = vperm.xlu0 %29, %v26
  %v31 = vpop.permute.xlu0 %30
  %34 = vset.pattern.permute.xlu0 0
  %35 = vperm.xlu0 %34, %v27
  %v36 = vpop.permute.xlu0 %35
  %vm38 = vcmask 261120
  %v40 = vsel %vm38, %v20, 0
  %v43 = vsel %vm38, %v21, 0
  %45 = vmatprep.subr.mxu0 0.0
  %46 = vmatpush1.msra.mxu0 %v22
  %47 = vmatprep.subr.mxu0 0.0
  %48 = vmatpush1.msra.mxu0 %v23
  %49 = vmatprep.subr.mxu0 0.0
  %50 = vmatpush1.msra.mxu0 %v24
  %51 = vmatprep.subr.mxu0 0.0
  %52 = vmatpush1.msra.mxu0 %v25
  %53 = vmatprep.subr.mxu0 0.0
  %54 = vmatpush1.msra.mxu0 0.0
  %55 = vmatprep.subr.mxu0 0.0
  %56 = vmatpush1.msra.mxu0 0.0
  %57 = vmatprep.subr.mxu0 0.0
  %58 = vmatpush1.msra.mxu0 0.0
  %59 = vmatprep.subr.mxu0 0.0
  %60 = vmatpush1.msra.mxu0 0.0
  %61 = vmatprep.subr.mxu0 0.0
  %62 = vmatpush1.msra.mxu0 0.0
  %63 = vmatprep.subr.mxu0 0.0
  %64 = vmatpush1.msra.mxu0 0.0
  %65 = vmatprep.subr.mxu0 0.0
  %66 = vmatpush1.msra.mxu0 0.0
  %67 = vmatprep.subr.mxu0 0.0
  %68 = vmatpush1.msra.mxu0 0.0
  %69 = vmatprep.subr.mxu0 0.0
  %70 = vmatpush1.msra.mxu0 0.0
  %71 = vmatprep.subr.mxu0 0.0
  %72 = vmatpush1.msra.mxu0 0.0
  %73 = vmatprep.subr.mxu0 0.0
  %74 = vmatpush1.msra.mxu0 0.0
  %75 = vmatprep.subr.mxu0 0.0
  %76 = vmatpush1.msra.mxu0 0.0
  %77 = vmatprep.subr.mxu0 0.0
  %78 = vmatpush1.msra.mxu0 0.0
  %79 = vmatprep.subr.mxu0 0.0
  %80 = vmatpush1.msra.mxu0 0.0
  %81 = vmatprep.subr.mxu0 0.0
  %82 = vmatpush1.msra.mxu0 0.0
  %83 = vmatprep.subr.mxu0 0.0
  %84 = vmatpush1.msra.mxu0 0.0
  %85 = vmatprep.subr.mxu0 0.0
  %86 = vmatpush1.msra.mxu0 0.0
  %87 = vmatprep.subr.mxu0 0.0
  %88 = vmatpush1.msra.mxu0 0.0
  %89 = vmatprep.subr.mxu0 0.0
  %90 = vmatpush1.msra.mxu0 0.0
  %91 = vmatprep.subr.mxu0 0.0
  %92 = vmatpush1.msra.mxu0 0.0
  %93 = vmatprep.subr.mxu0 0.0
  %94 = vmatpush1.msra.mxu0 0.0
  %95 = vmatprep.subr.mxu0 0.0
  %96 = vmatpush1.msra.mxu0 0.0
  %97 = vmatprep.subr.mxu0 0.0
  %98 = vmatpush1.msra.mxu0 0.0
  %99 = vmatprep.subr.mxu0 0.0
  %100 = vmatpush1.msra.mxu0 0.0
  %101 = vmatprep.subr.mxu0 0.0
  %102 = vmatpush1.msra.mxu0 0.0
  %103 = vmatprep.subr.mxu0 0.0
  %104 = vmatpush1.msra.mxu0 0.0
  %105 = vmatprep.subr.mxu0 0.0
  %106 = vmatpush1.msra.mxu0 0.0
  %107 = vmatprep.subr.mxu0 0.0
  %108 = vmatpush1.msra.mxu0 0.0
  %109 = vmatprep.mubr.f32.mxu0 0.0
  %110 = vmatmul.mubr.f32.gmra.mrb[0].mxu0 %v40
  %v111 = vpop.f32.mrb[0].mxu0
  %v112 = vadd.f32 %v31, %v111
  %v113 = vpop.f32.mrb[0].mxu0
  %114 = vmatprep.mubr.f32.mxu0 0.0
  %115 = vmatmul.mubr.f32.gmra.mrb[0].mxu0 %v43
  %v116 = vpop.f32.mrb[0].mxu0
  %v117 = vadd.f32 %v36, %v116
  %v118 = vpop.f32.mrb[0].mxu0
  %119 = vdwg.mxu0
  %v120 = vtanh.pop %v112
  %v121 = vtanh.pop %v117
  %v122 = vld [vmem:[%s3] sm:$0x3]
  %v123 = vld [vmem:[%s4] sm:$0x3]
  %125 = vset.pattern.permute.xlu0 0
  %126 = vperm.xlu0 %125, %v123
  %v127 = vpop.permute.xlu0 %126
  %vm129 = vcmask 130048
  %v131 = vsel %vm129, %v122, 0
  %133 = vmatprep.subr.mxu0 0.0
  %134 = vmatpush1.msra.mxu0 %v120
  %135 = vmatprep.subr.mxu0 0.0
  %136 = vmatpush1.msra.mxu0 %v121
  %137 = vmatprep.subr.mxu0 0.0
  %138 = vmatpush1.msra.mxu0 0.0
  %139 = vmatprep.subr.mxu0 0.0
  %140 = vmatpush1.msra.mxu0 0.0
  %141 = vmatprep.subr.mxu0 0.0
  %142 = vmatpush1.msra.mxu0 0.0
  %143 = vmatprep.subr.mxu0 0.0
  %144 = vmatpush1.msra.mxu0 0.0
  %145 = vmatprep.subr.mxu0 0.0
  %146 = vmatpush1.msra.mxu0 0.0
  %147 = vmatprep.subr.mxu0 0.0
  %148 = vmatpush1.msra.mxu0 0.0
  %149 = vmatprep.subr.mxu0 0.0
  %150 = vmatpush1.msra.mxu0 0.0
  %151 = vmatprep.subr.mxu0 0.0
  %152 = vmatpush1.msra.mxu0 0.0
  %153 = vmatprep.subr.mxu0 0.0
  %154 = vmatpush1.msra.mxu0 0.0
  %155 = vmatprep.subr.mxu0 0.0
  %156 = vmatpush1.msra.mxu0 0.0
  %157 = vmatprep.subr.mxu0 0.0
  %158 = vmatpush1.msra.mxu0 0.0
  %159 = vmatprep.subr.mxu0 0.0
  %160 = vmatpush1.msra.mxu0 0.0
  %161 = vmatprep.subr.mxu0 0.0
  %162 = vmatpush1.msra.mxu0 0.0
  %163 = vmatprep.subr.mxu0 0.0
  %164 = vmatpush1.msra.mxu0 0.0
  %165 = vmatprep.subr.mxu0 0.0
  %166 = vmatpush1.msra.mxu0 0.0
  %167 = vmatprep.subr.mxu0 0.0
  %168 = vmatpush1.msra.mxu0 0.0
  %169 = vmatprep.subr.mxu0 0.0
  %170 = vmatpush1.msra.mxu0 0.0
  %171 = vmatprep.subr.mxu0 0.0
  %172 = vmatpush1.msra.mxu0 0.0
  %173 = vmatprep.subr.mxu0 0.0
  %174 = vmatpush1.msra.mxu0 0.0
  %175 = vmatprep.subr.mxu0 0.0
  %176 = vmatpush1.msra.mxu0 0.0
  %177 = vmatprep.subr.mxu0 0.0
  %178 = vmatpush1.msra.mxu0 0.0
  %179 = vmatprep.subr.mxu0 0.0
  %180 = vmatpush1.msra.mxu0 0.0
  %181 = vmatprep.subr.mxu0 0.0
  %182 = vmatpush1.msra.mxu0 0.0
  %183 = vmatprep.subr.mxu0 0.0
  %184 = vmatpush1.msra.mxu0 0.0
  %185 = vmatprep.subr.mxu0 0.0
  %186 = vmatpush1.msra.mxu0 0.0
  %187 = vmatprep.subr.mxu0 0.0
  %188 = vmatpush1.msra.mxu0 0.0
  %189 = vmatprep.subr.mxu0 0.0
  %190 = vmatpush1.msra.mxu0 0.0
  %191 = vmatprep.subr.mxu0 0.0
  %192 = vmatpush1.msra.mxu0 0.0
  %193 = vmatprep.subr.mxu0 0.0
  %194 = vmatpush1.msra.mxu0 0.0
  %195 = vmatprep.subr.mxu0 0.0
  %196 = vmatpush1.msra.mxu0 0.0
  %197 = vmatprep.mubr.f32.mxu0 0.0
  %198 = vmatmul.mubr.f32.gmra.mrb[0].mxu0 %v131
  %v199 = vpop.f32.mrb[0].mxu0
  %v200 = vadd.f32 %v127, %v199
  %v201 = vpop.f32.mrb[0].mxu0
  %202 = vdwg.mxu0
  %v203 = vand.u32 2147483647, %v200
  %v204 = vsub.f32 0.0, %v203
  %v205 = vmul.f32 %v204, 1.442695
  %v206 = vpow.pop %v205
  %vm207 = vcmp.ge.f32.partialorder %v200, 0.0
  %v208 = vsel %vm207, 1.0, %v206
  %v209 = vadd.f32 %v206, 1.0
  %v210 = vrcp.pop %v209
  %v211 = vmul.f32 %v208, %v210
  %v212 = vsub.f32 1.0, %v211
  %v213 = vadd.f32 %v212, 1e-08
  %v214 = vrcp.pop %v213
  %v215 = vmul.f32 1e-08, %v214
  %v216 = vadd.f32 %v211, %v215
  %v217 = vlog2.pop %v216
  %v218 = vmul.f32 %v217, 0.6931472
  %v220 = vrot.slane %v211, 6
  %vm222 = vcmask 1041408
  %v223 = vsel %vm222, %v218, %v220
  %224 = vst [vmem:[%s5] sm:$0xf] %v223
  // Predicated region
  $region22: #{inference_forward.1} parent=0 // pred_check
    _
  $region23: #{inference_forward.1} parent=0 // pred_check_branch
    %226 = sbr.rel (0) target = $region25
  $region24: #{inference_forward.1} parent=0 // pred_region
    _
  $region25: #{inference_forward.1} parent=0 // pred_fallthru
    _
  // Predicated region
  $region26: #{inference_forward.1} parent=0 // pred_check
    _
  $region27: #{inference_forward.1} parent=0 // pred_check_branch
    %228 = sbr.rel (0) target = $region29
  $region28: #{inference_forward.1} parent=0 // pred_region
    _
  $region29: #{inference_forward.1} parent=0 // pred_fallthru
    _

</llo_original>
